<compile_context>
chip_gen: v7x
topology: tpu7x:2x2x1
jax: 0.10.0
libtpu: 0.0.40
codegen_flags: <defaults>
</compile_context>

<pallas_src>
import math

import jax
import jax.numpy as jnp
from jax.experimental import pallas as pl
from jax.experimental.pallas import tpu as pltpu


def _round_up(x, m):
    return ((x + m - 1) // m) * m


# ----------------------------- kernels --------------------------------------

def _rf_kernel_cond(x_ref, c_ref,
                    w1x_ref, w1u_ref, b1_ref,
                    w2_ref, b2_ref, w3_ref, b3_ref, y_ref):
    """y = x + W3 relu(W2 relu(W1 [x ; cond] + b1) + b2) + b3 for one row tile.

    torch's concat + single matmul is expressed as the equivalent sum of two
    split-weight matmuls (x block / conditioning block), so the concatenated
    tensor is never materialized in HBM.  MXU operands are cast to the stored
    weight dtype (f32 or bf16); accumulation, bias add, ReLU and the residual
    add stay in f32.
    """
    x = x_ref[...]                                     # f32 (bm, dim)
    wdt = w1x_ref.dtype
    h = (jnp.dot(x.astype(wdt), w1x_ref[...], preferred_element_type=jnp.float32)
         + jnp.dot(c_ref[...].astype(wdt), w1u_ref[...],
                   preferred_element_type=jnp.float32)
         + b1_ref[...])
    h = jnp.maximum(h, 0.0)
    h = jnp.maximum(
        jnp.dot(h.astype(wdt), w2_ref[...], preferred_element_type=jnp.float32)
        + b2_ref[...], 0.0)
    # TODO(synk): nn.Dropout is applied as identity (eval / p=0 semantics only).
    out = (jnp.dot(h.astype(wdt), w3_ref[...], preferred_element_type=jnp.float32)
           + b3_ref[...])
    y_ref[...] = x + out


def _rf_kernel_uncond(x_ref, w1_ref, b1_ref, w2_ref, b2_ref, w3_ref, b3_ref,
                      y_ref):
    """y = x + net(x) for the input_dim == 0 / u=None configuration."""
    x = x_ref[...]
    wdt = w1_ref.dtype
    h = jnp.maximum(
        jnp.dot(x.astype(wdt), w1_ref[...], preferred_element_type=jnp.float32)
        + b1_ref[...], 0.0)
    h = jnp.maximum(
        jnp.dot(h.astype(wdt), w2_ref[...], preferred_element_type=jnp.float32)
        + b2_ref[...], 0.0)
    out = (jnp.dot(h.astype(wdt), w3_ref[...], preferred_element_type=jnp.float32)
           + b3_ref[...])
    y_ref[...] = x + out


# ----------------------------- spec helpers ----------------------------------

def _row_spec(bm, feat):
    # tile over batch rows, full feature width
    return pl.BlockSpec((bm, feat), lambda i: (i, 0))


def _full_spec(arr):
    # whole (small) parameter resident in VMEM; constant block index across the
    # grid, so the pipeline only DMAs it once.
    return pl.BlockSpec(arr.shape, lambda i: (0, 0))


def _vmem_capacity_bytes():
    """Physical VMEM per core (generation-aware); conservative fallback."""
    try:
        return int(pltpu.get_tpu_info().vmem_capacity_bytes)
    except Exception:
        return 64 * 1024 * 1024


def _choose_bm(rows, per_row_bytes, weight_bytes, vmem_cap):
    """Largest row tile that fits ~half of physical VMEM after subtracting the
    (double-buffered) resident weights; rounded to a multiple of 8."""
    budget = max(int(vmem_cap * 0.5) - 2 * weight_bytes, 4 * 1024 * 1024)
    bm = max(8, (budget // max(per_row_bytes, 1)) // 8 * 8)
    bm = min(bm, _round_up(rows, 8))
    if rows > 8:
        # Target >= 4 grid steps (>= 2 per v7x TensorCore) for pipelining /
        # megacore, but do not shrink tiles below 512 rows to get there.
        quarter = _round_up(pl.cdiv(rows, 4), 8)
        bm = min(bm, max(quarter, min(512, bm)))
    return max(8, (bm // 8) * 8)


# ----------------------------- jitted forward --------------------------------

def _rf_forward_2d(params, x2d, u2d):
    """Forward on flattened rows. x2d: (rows, dim) f32; u2d: (rows, in) or None."""
    rows, dim = x2d.shape
    hidden = params["b1"].shape[-1]
    wdt = params["w2"].dtype

    if u2d is not None:
        # Conditioning prep (tanh / arccos / cheby linear / cos) stays in plain
        # JAX: Mosaic has no guaranteed arccos lowering.  Under jit it fuses
        # with the concat and the dtype cast, so no extra HBM pass is added,
        # and the single fused `cond` stream feeds one split-W1 matmul.
        ut = jnp.tanh(u2d) / (1.0 + 0.001)
        cheb = jnp.cos(jnp.arccos(ut) @ params["wc"] + params["bc"])
        cond = jnp.concatenate([ut, cheb], axis=-1).astype(wdt)   # (rows, dim)
        row_inputs = [x2d, cond]
        weights = [params["w1x"], params["w1u"], params["b1"],
                   params["w2"], params["b2"], params["w3"], params["b3"]]
        kernel = _rf_kernel_cond
        in0 = params["w1x"].shape[0] + params["w1u"].shape[0]
    else:
        row_inputs = [x2d]
        weights = [params["w1"], params["b1"], params["w2"],
                   params["b2"], params["w3"], params["b3"]]
        kernel = _rf_kernel_uncond
        in0 = params["w1"].shape[0]

    weight_bytes = sum(int(p.size) * p.dtype.itemsize for p in weights)
    in_row_bytes = sum(a.shape[1] * a.dtype.itemsize for a in row_inputs)
    out_row_bytes = dim * 4
    # double-buffered in/out row streams + two live f32 hidden activations
    # + the f32 residual/out temporary
    per_row = 2 * (in_row_bytes + out_row_bytes) + 2 * hidden * 4 + dim * 4

    vmem_cap = _vmem_capacity_bytes()
    bm = _choose_bm(rows, per_row, weight_bytes, vmem_cap)
    grid = (pl.cdiv(rows, bm),)          # ragged last block; no host-side pad

    flops = 2 * rows * (in0 * hidden + hidden * hidden + hidden * dim)
    bytes_acc = (sum(int(a.size) * a.dtype.itemsize for a in row_inputs)
                 + weight_bytes + rows * dim * 4)
    ce = pl.CostEstimate(flops=flops, transcendentals=0,
                         bytes_accessed=bytes_acc)

    needed = bm * per_row + 2 * weight_bytes
    vmem_limit = int(min(0.9 * vmem_cap,
                         max(needed + 4 * 1024 * 1024, 16 * 1024 * 1024)))
    cp = pltpu.CompilerParams(
        dimension_semantics=("parallel",),
        vmem_limit_bytes=vmem_limit,
    )

    in_specs = ([_row_spec(bm, a.shape[1]) for a in row_inputs]
                + [_full_spec(p) for p in weights])

    return pl.pallas_call(
        kernel,
        out_shape=jax.ShapeDtypeStruct((rows, dim), jnp.float32),
        grid=grid,
        in_specs=in_specs,
        out_specs=_row_spec(bm, dim),
        compiler_params=cp,
        cost_estimate=ce,
    )(*row_inputs, *weights)


_rf_forward_2d_jit = jax.jit(_rf_forward_2d)


# ----------------------------- module wrapper --------------------------------

class ResidualFlowPallas:
    """Forward (reverse=False, LDJ=False) pass of the PyTorch ResidualFlow."""

    def __init__(self, dim, hidden_dim, input_dim=0, dropout=0.0, LDJ=False,
                 param_dtype=jnp.float32, key=None):
        if key is None:
            key = jax.random.PRNGKey(0)
        self.dim = dim
        self.hidden_dim = hidden_dim
        self.input_dim = input_dim
        self.dropout = dropout
        self.LDJ = LDJ
        self.param_dtype = param_dtype

        in0 = dim + dim * (input_dim > 0)
        self.in0 = in0
        k1, k2, k3, k4, k5 = jax.random.split(key, 5)

        def xavier(k, fan_in, fan_out):
            bound = math.sqrt(6.0 / (fan_in + fan_out))
            # stored transposed as (in, out) so the kernel computes x @ W
            return jax.random.uniform(k, (fan_in, fan_out), jnp.float32,
                                      minval=-bound, maxval=bound)

        # net = Linear(in0,H) -> ReLU -> Linear(H,H) -> ReLU -> Dropout -> Linear(H,dim)
        # f32 master copies (used by the pure-JAX reference)
        self.w1 = xavier(k1, in0, hidden_dim)
        self.b1 = jnp.zeros((1, hidden_dim), jnp.float32)
        self.w2 = xavier(k2, hidden_dim, hidden_dim)
        self.b2 = jnp.zeros((1, hidden_dim), jnp.float32)
        self.w3 = xavier(k3, hidden_dim, dim)
        self.b3 = jnp.zeros((1, dim), jnp.float32)

        # kernel parameter pytree: weights pre-cast to param_dtype, biases kept
        # f32 (f32 accumulation), W1 pre-split into x / conditioning row blocks.
        params = {"b1": self.b1,
                  "w2": self.w2.astype(param_dtype), "b2": self.b2,
                  "w3": self.w3.astype(param_dtype), "b3": self.b3}
        if input_dim > 0:
            params["w1x"] = self.w1[:dim].astype(param_dtype)
            params["w1u"] = self.w1[dim:].astype(param_dtype)   # [ut ; cheb] rows fused

            # cheby weight ~ Exponential(lambda=5), bias ~ default torch Linear init
            lam = 5.0
            u01 = jax.random.uniform(k4, (input_dim, dim - input_dim),
                                     jnp.float32, minval=1e-6, maxval=1.0)
            self.wc = -jnp.log(u01) / lam
            bb = 1.0 / math.sqrt(input_dim)
            self.bc = jax.random.uniform(k5, (1, dim - input_dim), jnp.float32,
                                         minval=-bb, maxval=bb)
            params["wc"] = self.wc
            params["bc"] = self.bc
        else:
            params["w1"] = self.w1.astype(param_dtype)
        self.params = params

    # pure-JAX reference used only for correctness checking (f32 weights)
    def reference(self, x, u=None):
        x2d = x.reshape(-1, self.dim).astype(jnp.float32)
        if u is not None:
            u2d = u.reshape(-1, self.input_dim).astype(jnp.float32)
            ut = jnp.tanh(u2d) / (1.0 + 0.001)
            cheb = jnp.cos(jnp.arccos(ut) @ self.wc + self.bc)
            xe = jnp.concatenate([x2d, ut, cheb], axis=-1)
        else:
            xe = x2d
        h = jax.nn.relu(xe @ self.w1 + self.b1)
        h = jax.nn.relu(h @ self.w2 + self.b2)
        out = h @ self.w3 + self.b3
        return (x2d + out).reshape(x.shape)

    def __call__(self, x, u=None, reverse=False):
        if reverse:
            # TODO(synk): reverse-mode fixed-point inversion (data-dependent
            # early-exit while loop) is not implemented as a Pallas kernel.
            raise NotImplementedError("reverse pass not implemented")

        lead = x.shape[:-1]
        x2d = x.reshape(-1, self.dim).astype(jnp.float32)
        u2d = (None if u is None
               else u.reshape(-1, self.input_dim).astype(jnp.float32))

        y2d = _rf_forward_2d_jit(self.params, x2d, u2d)
        y = y2d.reshape(*lead, self.dim)
        logdet = 0  # LDJ=False path of the reference module
        # TODO(synk): LDJ=True path (vmap(jacrev) + slogdet) not translated.
        return y, logdet


# ----------------------------- demo / check ----------------------------------

if __name__ == "__main__":
    key = jax.random.PRNGKey(0)
    kx, ku, kp1, kp2, kx2 = jax.random.split(key, 5)

    dim, hidden_dim, input_dim = 8, 32, 4
    B, T = 2, 8                                  # 16 rows total
    x = jax.random.normal(kx, (B, T, dim), jnp.float32)
    u = jax.random.normal(ku, (B, T, input_dim), jnp.float32)

    # conditioned flow (u provided; exercises the fused cond stream), f32 params
    flow_u = ResidualFlowPallas(dim, hidden_dim, input_dim=input_dim, key=kp1)
    y_u, logdet_u = flow_u(x, u)
    y_u = jax.block_until_ready(y_u)
    assert jnp.allclose(y_u, flow_u.reference(x, u), atol=1e-5, rtol=1e-5)

    # default configuration (input_dim=0, u=None), 15 rows -> exercises the
    # pad-free ragged last block (masked output store)
    x_odd = jax.random.normal(kx2, (3, 5, dim), jnp.float32)   # 15 rows
    flow = ResidualFlowPallas(dim, hidden_dim, key=kp2)
    y, logdet = flow(x_odd)
    y = jax.block_until_ready(y)
    assert jnp.allclose(y, flow.reference(x_odd), atol=1e-5, rtol=1e-5)

    # bf16-weight variant (bf16 MXU operands + bf16 conditioning stream,
    # f32 accumulation / bias / ReLU / residual)
    flow_bf = ResidualFlowPallas(dim, hidden_dim, input_dim=input_dim,
                                 param_dtype=jnp.bfloat16, key=kp1)
    y_bf, _ = flow_bf(x, u)
    y_bf = jax.block_until_ready(y_bf)
    assert jnp.allclose(y_bf, flow_bf.reference(x, u), atol=5e-2, rtol=5e-2)

    assert y_u.shape == x.shape and y.shape == x_odd.shape
    assert logdet_u == 0 and logdet == 0

    print("KERNEL_OK")
</pallas_src>

<mosaic_0001>
module attributes {stable_mosaic.version = 11 : i64} {
  func.func @_rf_kernel_cond(%arg0: i32, %arg1: memref<16x8xf32, #tpu.memory_space<vmem>>, %arg2: memref<16x8xf32, #tpu.memory_space<vmem>>, %arg3: memref<8x32xf32, #tpu.memory_space<vmem>>, %arg4: memref<8x32xf32, #tpu.memory_space<vmem>>, %arg5: memref<1x32xf32, #tpu.memory_space<vmem>>, %arg6: memref<32x32xf32, #tpu.memory_space<vmem>>, %arg7: memref<1x32xf32, #tpu.memory_space<vmem>>, %arg8: memref<32x8xf32, #tpu.memory_space<vmem>>, %arg9: memref<1x8xf32, #tpu.memory_space<vmem>>, %arg10: memref<16x8xf32, #tpu.memory_space<vmem>>) attributes {dimension_semantics = [#tpu.dimension_semantics<parallel>], iteration_bounds = array<i64: 1>, scalar_prefetch = 0 : i64, scratch_operands = 0 : i64, tpu.core_type = #tpu.core_type<tc>, window_params = [{transform_indices = @transform_0, window_bounds = array<i64: 16, 8>}, {transform_indices = @transform_1, window_bounds = array<i64: 16, 8>}, {pipeline_mode = #tpu.pipeline_mode<synchronous>, transform_indices = @transform_2, window_bounds = array<i64: 8, 32>}, {pipeline_mode = #tpu.pipeline_mode<synchronous>, transform_indices = @transform_3, window_bounds = array<i64: 8, 32>}, {pipeline_mode = #tpu.pipeline_mode<synchronous>, transform_indices = @transform_4, window_bounds = array<i64: 1, 32>}, {pipeline_mode = #tpu.pipeline_mode<synchronous>, transform_indices = @transform_5, window_bounds = array<i64: 32, 32>}, {pipeline_mode = #tpu.pipeline_mode<synchronous>, transform_indices = @transform_6, window_bounds = array<i64: 1, 32>}, {pipeline_mode = #tpu.pipeline_mode<synchronous>, transform_indices = @transform_7, window_bounds = array<i64: 32, 8>}, {pipeline_mode = #tpu.pipeline_mode<synchronous>, transform_indices = @transform_8, window_bounds = array<i64: 1, 8>}, {transform_indices = @transform_9, window_bounds = array<i64: 16, 8>}]} {
    %c0 = arith.constant 0 : index
    %c0_0 = arith.constant 0 : index
    %0 = vector.load %arg1[%c0, %c0_0] : memref<16x8xf32, #tpu.memory_space<vmem>>, vector<16x8xf32>
    %c0_1 = arith.constant 0 : index
    %c0_2 = arith.constant 0 : index
    %1 = vector.load %arg3[%c0_1, %c0_2] : memref<8x32xf32, #tpu.memory_space<vmem>>, vector<8x32xf32>
    %cst = arith.constant dense<0.000000e+00> : vector<16x32xf32>
    %2 = tpu.matmul %0, %1, %cst {dimension_numbers = #tpu.dot_dimension_numbers<[1], [0], [0], [1], [0, 0, 1, 1], [], []>} : vector<16x8xf32>, vector<8x32xf32>, vector<16x32xf32> -> vector<16x32xf32>
    %c0_3 = arith.constant 0 : index
    %c0_4 = arith.constant 0 : index
    %3 = vector.load %arg2[%c0_3, %c0_4] : memref<16x8xf32, #tpu.memory_space<vmem>>, vector<16x8xf32>
    %c0_5 = arith.constant 0 : index
    %c0_6 = arith.constant 0 : index
    %4 = vector.load %arg4[%c0_5, %c0_6] : memref<8x32xf32, #tpu.memory_space<vmem>>, vector<8x32xf32>
    %cst_7 = arith.constant dense<0.000000e+00> : vector<16x32xf32>
    %5 = tpu.matmul %3, %4, %cst_7 {dimension_numbers = #tpu.dot_dimension_numbers<[1], [0], [0], [1], [0, 0, 1, 1], [], []>} : vector<16x8xf32>, vector<8x32xf32>, vector<16x32xf32> -> vector<16x32xf32>
    %6 = arith.addf %2, %5 : vector<16x32xf32>
    %c0_8 = arith.constant 0 : index
    %c0_9 = arith.constant 0 : index
    %7 = vector.load %arg5[%c0_8, %c0_9] : memref<1x32xf32, #tpu.memory_space<vmem>>, vector<1x32xf32>
    %8 = vector.broadcast %7 : vector<1x32xf32> to vector<16x32xf32>
    %9 = arith.addf %6, %8 : vector<16x32xf32>
    %cst_10 = arith.constant 0.000000e+00 : f32
    %10 = vector.broadcast %cst_10 : f32 to vector<16x32xf32>
    %11 = arith.maximumf %9, %10 : vector<16x32xf32>
    %c0_11 = arith.constant 0 : index
    %c0_12 = arith.constant 0 : index
    %12 = vector.load %arg6[%c0_11, %c0_12] : memref<32x32xf32, #tpu.memory_space<vmem>>, vector<32x32xf32>
    %cst_13 = arith.constant dense<0.000000e+00> : vector<16x32xf32>
    %13 = tpu.matmul %11, %12, %cst_13 {dimension_numbers = #tpu.dot_dimension_numbers<[1], [0], [0], [1], [0, 0, 1, 1], [], []>} : vector<16x32xf32>, vector<32x32xf32>, vector<16x32xf32> -> vector<16x32xf32>
    %c0_14 = arith.constant 0 : index
    %c0_15 = arith.constant 0 : index
    %14 = vector.load %arg7[%c0_14, %c0_15] : memref<1x32xf32, #tpu.memory_space<vmem>>, vector<1x32xf32>
    %15 = vector.broadcast %14 : vector<1x32xf32> to vector<16x32xf32>
    %16 = arith.addf %13, %15 : vector<16x32xf32>
    %cst_16 = arith.constant 0.000000e+00 : f32
    %17 = vector.broadcast %cst_16 : f32 to vector<16x32xf32>
    %18 = arith.maximumf %16, %17 : vector<16x32xf32>
    %c0_17 = arith.constant 0 : index
    %c0_18 = arith.constant 0 : index
    %19 = vector.load %arg8[%c0_17, %c0_18] : memref<32x8xf32, #tpu.memory_space<vmem>>, vector<32x8xf32>
    %cst_19 = arith.constant dense<0.000000e+00> : vector<16x8xf32>
    %20 = tpu.matmul %18, %19, %cst_19 {dimension_numbers = #tpu.dot_dimension_numbers<[1], [0], [0], [1], [0, 0, 1, 1], [], []>} : vector<16x32xf32>, vector<32x8xf32>, vector<16x8xf32> -> vector<16x8xf32>
    %c0_20 = arith.constant 0 : index
    %c0_21 = arith.constant 0 : index
    %21 = vector.load %arg9[%c0_20, %c0_21] : memref<1x8xf32, #tpu.memory_space<vmem>>, vector<1x8xf32>
    %22 = vector.broadcast %21 : vector<1x8xf32> to vector<16x8xf32>
    %23 = arith.addf %20, %22 : vector<16x8xf32>
    %24 = arith.addf %0, %23 : vector<16x8xf32>
    %c0_22 = arith.constant 0 : index
    %c0_23 = arith.constant 0 : index
    %25 = vector.load %arg10[%c0_22, %c0_23] : memref<16x8xf32, #tpu.memory_space<vmem>>, vector<16x8xf32>
    tpu.vector_store %arg10[%c0_22, %c0_23], %24 {strides = array<i32>} : memref<16x8xf32, #tpu.memory_space<vmem>>, vector<16x8xf32>,
    return
  }
  func.func @transform_0(%arg0: i32) -> (i32, i32) {
    %c0_i32 = arith.constant 0 : i32
    %c0_i32_0 = arith.constant 0 : i32
    return %arg0, %c0_i32 : i32, i32
  }
  func.func @transform_1(%arg0: i32) -> (i32, i32) {
    %c0_i32 = arith.constant 0 : i32
    %c0_i32_0 = arith.constant 0 : i32
    return %arg0, %c0_i32 : i32, i32
  }
  func.func @transform_2(%arg0: i32) -> (i32, i32) {
    %c0_i32 = arith.constant 0 : i32
    %c0_i32_0 = arith.constant 0 : i32
    %c0_i32_1 = arith.constant 0 : i32
    return %c0_i32, %c0_i32_0 : i32, i32
  }
  func.func @transform_3(%arg0: i32) -> (i32, i32) {
    %c0_i32 = arith.constant 0 : i32
    %c0_i32_0 = arith.constant 0 : i32
    %c0_i32_1 = arith.constant 0 : i32
    return %c0_i32, %c0_i32_0 : i32, i32
  }
  func.func @transform_4(%arg0: i32) -> (i32, i32) {
    %c0_i32 = arith.constant 0 : i32
    %c0_i32_0 = arith.constant 0 : i32
    %c0_i32_1 = arith.constant 0 : i32
    return %c0_i32, %c0_i32_0 : i32, i32
  }
  func.func @transform_5(%arg0: i32) -> (i32, i32) {
    %c0_i32 = arith.constant 0 : i32
    %c0_i32_0 = arith.constant 0 : i32
    %c0_i32_1 = arith.constant 0 : i32
    return %c0_i32, %c0_i32_0 : i32, i32
  }
  func.func @transform_6(%arg0: i32) -> (i32, i32) {
    %c0_i32 = arith.constant 0 : i32
    %c0_i32_0 = arith.constant 0 : i32
    %c0_i32_1 = arith.constant 0 : i32
    return %c0_i32, %c0_i32_0 : i32, i32
  }
  func.func @transform_7(%arg0: i32) -> (i32, i32) {
    %c0_i32 = arith.constant 0 : i32
    %c0_i32_0 = arith.constant 0 : i32
    %c0_i32_1 = arith.constant 0 : i32
    return %c0_i32, %c0_i32_0 : i32, i32
  }
  func.func @transform_8(%arg0: i32) -> (i32, i32) {
    %c0_i32 = arith.constant 0 : i32
    %c0_i32_0 = arith.constant 0 : i32
    %c0_i32_1 = arith.constant 0 : i32
    return %c0_i32, %c0_i32_0 : i32, i32
  }
  func.func @transform_9(%arg0: i32) -> (i32, i32) {
    %c0_i32 = arith.constant 0 : i32
    %c0_i32_0 = arith.constant 0 : i32
    return %arg0, %c0_i32 : i32, i32
  }
}

</mosaic_0001>

<llo_original>
// kernel: _rf_forward_2d.1
$region0: #{_rf_forward_2d.1}
  #allocation0 [shape = 'u32[]', space=smem, size = 0x4, offset = 0x4, fixed_abs, tag = 'smem constant byte address 0x4 - core index']
  #allocation1 [shape = 'u32[144,128]{1,0:T(1,128)}', space=vmem, size = 0x12000, scoped, tag = 'internal scratch']
  %s0 = inlined_call_operand.vmem [shape: f32[16,8], index: 0, kind: input, shape index: {}]
  %s1 = inlined_call_operand.vmem [shape: f32[16,8], index: 1, kind: input, shape index: {}]
  %s2 = inlined_call_operand.vmem [shape: f32[8,32], index: 2, kind: input, shape index: {}]
  %s3 = inlined_call_operand.vmem [shape: f32[8,32], index: 3, kind: input, shape index: {}]
  %s4 = inlined_call_operand.vmem [shape: f32[1,32], index: 4, kind: input, shape index: {}]
  %s5 = inlined_call_operand.vmem [shape: f32[32,32], index: 5, kind: input, shape index: {}]
  %s6 = inlined_call_operand.vmem [shape: f32[1,32], index: 6, kind: input, shape index: {}]
  %s7 = inlined_call_operand.vmem [shape: f32[32,8], index: 7, kind: input, shape index: {}]
  %s8 = inlined_call_operand.vmem [shape: f32[1,8], index: 8, kind: input, shape index: {}]
  %s9 = inlined_call_operand.vmem [shape: f32[16,8], index: 9, kind: output, shape index: {}]
  %s10 = sld [smem:[#allocation0]]
  $region46: #{_rf_forward_2d.1} parent=0
    _
  %s12 = ssub.s32 1, %s10
  %s13 = scalar_select 0, %s12, %s10
  // Predicated region
  $region2: #{_rf_forward_2d.1} parent=0 // pred_check
    _
  $region3: #{_rf_forward_2d.1} parent=0 // pred_check_branch
    %15 = sbr.rel (0) target = $region5
  $region4: #{_rf_forward_2d.1} parent=0 // pred_region
    _
  $region5: #{_rf_forward_2d.1} parent=0 // pred_fallthru
    _
  // Predicated region
  $region6: #{_rf_forward_2d.1} parent=0 // pred_check
    _
  $region7: #{_rf_forward_2d.1} parent=0 // pred_check_branch
    %17 = sbr.rel (0) target = $region9
  $region8: #{_rf_forward_2d.1} parent=0 // pred_region
    _
  $region9: #{_rf_forward_2d.1} parent=0 // pred_fallthru
    _
  // Predicated region
  $region10: #{_rf_forward_2d.1} parent=0 // pred_check
    _
  $region11: #{_rf_forward_2d.1} parent=0 // pred_check_branch
    %19 = sbr.rel (0) target = $region13
  $region12: #{_rf_forward_2d.1} parent=0 // pred_region
    _
  $region13: #{_rf_forward_2d.1} parent=0 // pred_fallthru
    _
  // Predicated region
  $region14: #{_rf_forward_2d.1} parent=0 // pred_check
    _
  $region15: #{_rf_forward_2d.1} parent=0 // pred_check_branch
    %21 = sbr.rel (0) target = $region17
  $region16: #{_rf_forward_2d.1} parent=0 // pred_region
    _
  $region17: #{_rf_forward_2d.1} parent=0 // pred_fallthru
    _
  // Predicated region
  $region18: #{_rf_forward_2d.1} parent=0 // pred_check
    _
  $region19: #{_rf_forward_2d.1} parent=0 // pred_check_branch
    %23 = sbr.rel (0) target = $region21
  $region20: #{_rf_forward_2d.1} parent=0 // pred_region
    _
  $region21: #{_rf_forward_2d.1} parent=0 // pred_fallthru
    _
  // Predicated region
  $region22: #{_rf_forward_2d.1} parent=0 // pred_check
    _
  $region23: #{_rf_forward_2d.1} parent=0 // pred_check_branch
    %25 = sbr.rel (0) target = $region25
  $region24: #{_rf_forward_2d.1} parent=0 // pred_region
    _
  $region25: #{_rf_forward_2d.1} parent=0 // pred_fallthru
    _
  // Predicated region
  $region26: #{_rf_forward_2d.1} parent=0 // pred_check
    _
  $region27: #{_rf_forward_2d.1} parent=0 // pred_check_branch
    %27 = sbr.rel (0) target = $region29
  $region28: #{_rf_forward_2d.1} parent=0 // pred_region
    _
  $region29: #{_rf_forward_2d.1} parent=0 // pred_fallthru
    _
  // Predicated region
  $region30: #{_rf_forward_2d.1} parent=0 // pred_check
    _
  $region31: #{_rf_forward_2d.1} parent=0 // pred_check_branch
    %29 = sbr.rel (0) target = $region33
  $region32: #{_rf_forward_2d.1} parent=0 // pred_region
    _
  $region33: #{_rf_forward_2d.1} parent=0 // pred_fallthru
    _
  // Predicated region
  $region34: #{_rf_forward_2d.1} parent=0 // pred_check
    _
  $region35: #{_rf_forward_2d.1} parent=0 // pred_check_branch
    %31 = sbr.rel (0) target = $region37
  $region36: #{_rf_forward_2d.1} parent=0 // pred_region
    _
  $region37: #{_rf_forward_2d.1} parent=0 // pred_fallthru
    _
  %v32 = vld [vmem:[%s0] sm:$0xff]
  %v33 = vld [vmem:[%s0 + $0x8] sm:$0xff]
  %v34 = vld [vmem:[%s2] sm:$0xff]
  %v35 = vld [vmem:[%s1] sm:$0xff]
  %v36 = vld [vmem:[%s1 + $0x8] sm:$0xff]
  %v37 = vld [vmem:[%s3] sm:$0xff]
  %vm38 = vcmask 64512
  %v40 = vsel %vm38, %v35, 0
  %v43 = vsel %vm38, %v36, 0
  %45 = vmatprep.subr.mxu0 0.0
  %46 = vmatpush1.msra.mxu0 %v37
  %47 = vmatprep.subr.mxu0 0.0
  %48 = vmatpush1.msra.mxu0 0.0
  %49 = vmatprep.subr.mxu0 0.0
  %50 = vmatpush1.msra.mxu0 0.0
  %51 = vmatprep.subr.mxu0 0.0
  %52 = vmatpush1.msra.mxu0 0.0
  %53 = vmatprep.subr.mxu0 0.0
  %54 = vmatpush1.msra.mxu0 0.0
  %55 = vmatprep.subr.mxu0 0.0
  %56 = vmatpush1.msra.mxu0 0.0
  %57 = vmatprep.subr.mxu0 0.0
  %58 = vmatpush1.msra.mxu0 0.0
  %59 = vmatprep.subr.mxu0 0.0
  %60 = vmatpush1.msra.mxu0 0.0
  %61 = vmatprep.subr.mxu0 0.0
  %62 = vmatpush1.msra.mxu0 0.0
  %63 = vmatprep.subr.mxu0 0.0
  %64 = vmatpush1.msra.mxu0 0.0
  %65 = vmatprep.subr.mxu0 0.0
  %66 = vmatpush1.msra.mxu0 0.0
  %67 = vmatprep.subr.mxu0 0.0
  %68 = vmatpush1.msra.mxu0 0.0
  %69 = vmatprep.subr.mxu0 0.0
  %70 = vmatpush1.msra.mxu0 0.0
  %71 = vmatprep.subr.mxu0 0.0
  %72 = vmatpush1.msra.mxu0 0.0
  %73 = vmatprep.subr.mxu0 0.0
  %74 = vmatpush1.msra.mxu0 0.0
  %75 = vmatprep.subr.mxu0 0.0
  %76 = vmatpush1.msra.mxu0 0.0
  %77 = vmatprep.subr.mxu0 0.0
  %78 = vmatpush1.msra.mxu0 0.0
  %79 = vmatprep.subr.mxu0 0.0
  %80 = vmatpush1.msra.mxu0 0.0
  %81 = vmatprep.subr.mxu0 0.0
  %82 = vmatpush1.msra.mxu0 0.0
  %83 = vmatprep.subr.mxu0 0.0
  %84 = vmatpush1.msra.mxu0 0.0
  %85 = vmatprep.subr.mxu0 0.0
  %86 = vmatpush1.msra.mxu0 0.0
  %87 = vmatprep.subr.mxu0 0.0
  %88 = vmatpush1.msra.mxu0 0.0
  %89 = vmatprep.subr.mxu0 0.0
  %90 = vmatpush1.msra.mxu0 0.0
  %91 = vmatprep.subr.mxu0 0.0
  %92 = vmatpush1.msra.mxu0 0.0
  %93 = vmatprep.subr.mxu0 0.0
  %94 = vmatpush1.msra.mxu0 0.0
  %95 = vmatprep.subr.mxu0 0.0
  %96 = vmatpush1.msra.mxu0 0.0
  %97 = vmatprep.subr.mxu0 0.0
  %98 = vmatpush1.msra.mxu0 0.0
  %99 = vmatprep.subr.mxu0 0.0
  %100 = vmatpush1.msra.mxu0 0.0
  %101 = vmatprep.subr.mxu0 0.0
  %102 = vmatpush1.msra.mxu0 0.0
  %103 = vmatprep.subr.mxu0 0.0
  %104 = vmatpush1.msra.mxu0 0.0
  %105 = vmatprep.subr.mxu0 0.0
  %106 = vmatpush1.msra.mxu0 0.0
  %107 = vmatprep.subr.mxu0 0.0
  %108 = vmatpush1.msra.mxu0 0.0
  %109 = vmatprep.mubr.f32.mxu0 0.0
  %110 = vmatmul.mubr.f32.gmra.mrb[0].mxu0 %v40
  %v111 = vpop.f32.mrb[0].mxu0
  %v112 = vadd.f32 0.0, %v111
  %v113 = vpop.f32.mrb[0].mxu0
  %114 = vmatprep.mubr.f32.mxu0 0.0
  %115 = vmatmul.mubr.f32.gmra.mrb[0].mxu0 %v43
  %v116 = vpop.f32.mrb[0].mxu0
  %v117 = vadd.f32 0.0, %v116
  %v118 = vpop.f32.mrb[0].mxu0
  %119 = vdwg.mxu0
  %v121 = vsel %vm38, %v32, 0
  %v124 = vsel %vm38, %v33, 0
  %126 = vmatprep.subr.mxu0 0.0
  %127 = vmatpush1.msra.mxu0 %v34
  %128 = vmatprep.subr.mxu0 0.0
  %129 = vmatpush1.msra.mxu0 0.0
  %130 = vmatprep.subr.mxu0 0.0
  %131 = vmatpush1.msra.mxu0 0.0
  %132 = vmatprep.subr.mxu0 0.0
  %133 = vmatpush1.msra.mxu0 0.0
  %134 = vmatprep.subr.mxu0 0.0
  %135 = vmatpush1.msra.mxu0 0.0
  %136 = vmatprep.subr.mxu0 0.0
  %137 = vmatpush1.msra.mxu0 0.0
  %138 = vmatprep.subr.mxu0 0.0
  %139 = vmatpush1.msra.mxu0 0.0
  %140 = vmatprep.subr.mxu0 0.0
  %141 = vmatpush1.msra.mxu0 0.0
  %142 = vmatprep.subr.mxu0 0.0
  %143 = vmatpush1.msra.mxu0 0.0
  %144 = vmatprep.subr.mxu0 0.0
  %145 = vmatpush1.msra.mxu0 0.0
  %146 = vmatprep.subr.mxu0 0.0
  %147 = vmatpush1.msra.mxu0 0.0
  %148 = vmatprep.subr.mxu0 0.0
  %149 = vmatpush1.msra.mxu0 0.0
  %150 = vmatprep.subr.mxu0 0.0
  %151 = vmatpush1.msra.mxu0 0.0
  %152 = vmatprep.subr.mxu0 0.0
  %153 = vmatpush1.msra.mxu0 0.0
  %154 = vmatprep.subr.mxu0 0.0
  %155 = vmatpush1.msra.mxu0 0.0
  %156 = vmatprep.subr.mxu0 0.0
  %157 = vmatpush1.msra.mxu0 0.0
  %158 = vmatprep.subr.mxu0 0.0
  %159 = vmatpush1.msra.mxu0 0.0
  %160 = vmatprep.subr.mxu0 0.0
  %161 = vmatpush1.msra.mxu0 0.0
  %162 = vmatprep.subr.mxu0 0.0
  %163 = vmatpush1.msra.mxu0 0.0
  %164 = vmatprep.subr.mxu0 0.0
  %165 = vmatpush1.msra.mxu0 0.0
  %166 = vmatprep.subr.mxu0 0.0
  %167 = vmatpush1.msra.mxu0 0.0
  %168 = vmatprep.subr.mxu0 0.0
  %169 = vmatpush1.msra.mxu0 0.0
  %170 = vmatprep.subr.mxu0 0.0
  %171 = vmatpush1.msra.mxu0 0.0
  %172 = vmatprep.subr.mxu0 0.0
  %173 = vmatpush1.msra.mxu0 0.0
  %174 = vmatprep.subr.mxu0 0.0
  %175 = vmatpush1.msra.mxu0 0.0
  %176 = vmatprep.subr.mxu0 0.0
  %177 = vmatpush1.msra.mxu0 0.0
  %178 = vmatprep.subr.mxu0 0.0
  %179 = vmatpush1.msra.mxu0 0.0
  %180 = vmatprep.subr.mxu0 0.0
  %181 = vmatpush1.msra.mxu0 0.0
  %182 = vmatprep.subr.mxu0 0.0
  %183 = vmatpush1.msra.mxu0 0.0
  %184 = vmatprep.subr.mxu0 0.0
  %185 = vmatpush1.msra.mxu0 0.0
  %186 = vmatprep.subr.mxu0 0.0
  %187 = vmatpush1.msra.mxu0 0.0
  %188 = vmatprep.subr.mxu0 0.0
  %189 = vmatpush1.msra.mxu0 0.0
  %190 = vmatprep.mubr.f32.mxu0 0.0
  %191 = vmatmul.mubr.f32.gmra.mrb[0].mxu0 %v121
  %v192 = vpop.f32.mrb[0].mxu0
  %v193 = vadd.f32 %v112, %v192
  %v194 = vpop.f32.mrb[0].mxu0
  %195 = vmatprep.mubr.f32.mxu0 0.0
  %196 = vmatmul.mubr.f32.gmra.mrb[0].mxu0 %v124
  %v197 = vpop.f32.mrb[0].mxu0
  %v198 = vadd.f32 %v117, %v197
  %v199 = vpop.f32.mrb[0].mxu0
  %200 = vdwg.mxu0
  %v201 = vld [vmem:[%s4] sm:$0x1]
  %v203 = vlaneseq
  %v204 = vshrl.u32 %v203, 7
  %v205 = vsub.s32 0, %v204
  %v206 = vrot.slane %v201, %v205
  %v208 = vadd.f32 %v193, %v206
  %v209 = vadd.f32 %v198, %v206
  %v210 = vmax.f32 %v208, 0.0
  %v211 = vmax.f32 %v209, 0.0
  %v212 = vld [vmem:[%s5] sm:$0xff]
  %v213 = vld [vmem:[%s5 + $0x8] sm:$0xff]
  %v214 = vld [vmem:[%s5 + $0x10] sm:$0xff]
  %v215 = vld [vmem:[%s5 + $0x18] sm:$0xff]
  %v216 = vld [vmem:[%s6] sm:$0x1]
  %v218 = vlaneseq
  %v219 = vshrl.u32 %v218, 7
  %v220 = vsub.s32 0, %v219
  %v221 = vrot.slane %v216, %v220
  %vm223 = vcmask 261120
  %v225 = vsel %vm223, %v210, 0
  %v228 = vsel %vm223, %v211, 0
  %230 = vmatprep.subr.mxu0 0.0
  %231 = vmatpush1.msra.mxu0 %v212
  %232 = vmatprep.subr.mxu0 0.0
  %233 = vmatpush1.msra.mxu0 %v213
  %234 = vmatprep.subr.mxu0 0.0
  %235 = vmatpush1.msra.mxu0 %v214
  %236 = vmatprep.subr.mxu0 0.0
  %237 = vmatpush1.msra.mxu0 %v215
  %238 = vmatprep.subr.mxu0 0.0
  %239 = vmatpush1.msra.mxu0 0.0
  %240 = vmatprep.subr.mxu0 0.0
  %241 = vmatpush1.msra.mxu0 0.0
  %242 = vmatprep.subr.mxu0 0.0
  %243 = vmatpush1.msra.mxu0 0.0
  %244 = vmatprep.subr.mxu0 0.0
  %245 = vmatpush1.msra.mxu0 0.0
  %246 = vmatprep.subr.mxu0 0.0
  %247 = vmatpush1.msra.mxu0 0.0
  %248 = vmatprep.subr.mxu0 0.0
  %249 = vmatpush1.msra.mxu0 0.0
  %250 = vmatprep.subr.mxu0 0.0
  %251 = vmatpush1.msra.mxu0 0.0
  %252 = vmatprep.subr.mxu0 0.0
  %253 = vmatpush1.msra.mxu0 0.0
  %254 = vmatprep.subr.mxu0 0.0
  %255 = vmatpush1.msra.mxu0 0.0
  %256 = vmatprep.subr.mxu0 0.0
  %257 = vmatpush1.msra.mxu0 0.0
  %258 = vmatprep.subr.mxu0 0.0
  %259 = vmatpush1.msra.mxu0 0.0
  %260 = vmatprep.subr.mxu0 0.0
  %261 = vmatpush1.msra.mxu0 0.0
  %262 = vmatprep.subr.mxu0 0.0
  %263 = vmatpush1.msra.mxu0 0.0
  %264 = vmatprep.subr.mxu0 0.0
  %265 = vmatpush1.msra.mxu0 0.0
  %266 = vmatprep.subr.mxu0 0.0
  %267 = vmatpush1.msra.mxu0 0.0
  %268 = vmatprep.subr.mxu0 0.0
  %269 = vmatpush1.msra.mxu0 0.0
  %270 = vmatprep.subr.mxu0 0.0
  %271 = vmatpush1.msra.mxu0 0.0
  %272 = vmatprep.subr.mxu0 0.0
  %273 = vmatpush1.msra.mxu0 0.0
  %274 = vmatprep.subr.mxu0 0.0
  %275 = vmatpush1.msra.mxu0 0.0
  %276 = vmatprep.subr.mxu0 0.0
  %277 = vmatpush1.msra.mxu0 0.0
  %278 = vmatprep.subr.mxu0 0.0
  %279 = vmatpush1.msra.mxu0 0.0
  %280 = vmatprep.subr.mxu0 0.0
  %281 = vmatpush1.msra.mxu0 0.0
  %282 = vmatprep.subr.mxu0 0.0
  %283 = vmatpush1.msra.mxu0 0.0
  %284 = vmatprep.subr.mxu0 0.0
  %285 = vmatpush1.msra.mxu0 0.0
  %286 = vmatprep.subr.mxu0 0.0
  %287 = vmatpush1.msra.mxu0 0.0
  %288 = vmatprep.subr.mxu0 0.0
  %289 = vmatpush1.msra.mxu0 0.0
  %290 = vmatprep.subr.mxu0 0.0
  %291 = vmatpush1.msra.mxu0 0.0
  %292 = vmatprep.subr.mxu0 0.0
  %293 = vmatpush1.msra.mxu0 0.0
  %294 = vmatprep.mubr.f32.mxu0 0.0
  %295 = vmatmul.mubr.f32.gmra.mrb[0].mxu0 %v225
  %v296 = vpop.f32.mrb[0].mxu0
  %v297 = vadd.f32 %v221, %v296
  %v298 = vpop.f32.mrb[0].mxu0
  %299 = vmatprep.mubr.f32.mxu0 0.0
  %300 = vmatmul.mubr.f32.gmra.mrb[0].mxu0 %v228
  %v301 = vpop.f32.mrb[0].mxu0
  %v302 = vadd.f32 %v221, %v301
  %v303 = vpop.f32.mrb[0].mxu0
  %304 = vdwg.mxu0
  %v305 = vmax.f32 %v297, 0.0
  %v306 = vmax.f32 %v302, 0.0
  %v307 = vld [vmem:[%s7] sm:$0xff]
  %v308 = vld [vmem:[%s7 + $0x8] sm:$0xff]
  %v309 = vld [vmem:[%s7 + $0x10] sm:$0xff]
  %v310 = vld [vmem:[%s7 + $0x18] sm:$0xff]
  %v311 = vld [vmem:[%s8] sm:$0x1]
  %v313 = vlaneseq
  %v314 = vshrl.u32 %v313, 7
  %v315 = vsub.s32 0, %v314
  %v316 = vrot.slane %v311, %v315
  %v319 = vsel %vm223, %v305, 0
  %v322 = vsel %vm223, %v306, 0
  %324 = vmatprep.subr.mxu0 0.0
  %325 = vmatpush1.msra.mxu0 %v307
  %326 = vmatprep.subr.mxu0 0.0
  %327 = vmatpush1.msra.mxu0 %v308
  %328 = vmatprep.subr.mxu0 0.0
  %329 = vmatpush1.msra.mxu0 %v309
  %330 = vmatprep.subr.mxu0 0.0
  %331 = vmatpush1.msra.mxu0 %v310
  %332 = vmatprep.subr.mxu0 0.0
  %333 = vmatpush1.msra.mxu0 0.0
  %334 = vmatprep.subr.mxu0 0.0
  %335 = vmatpush1.msra.mxu0 0.0
  %336 = vmatprep.subr.mxu0 0.0
  %337 = vmatpush1.msra.mxu0 0.0
  %338 = vmatprep.subr.mxu0 0.0
  %339 = vmatpush1.msra.mxu0 0.0
  %340 = vmatprep.subr.mxu0 0.0
  %341 = vmatpush1.msra.mxu0 0.0
  %342 = vmatprep.subr.mxu0 0.0
  %343 = vmatpush1.msra.mxu0 0.0
  %344 = vmatprep.subr.mxu0 0.0
  %345 = vmatpush1.msra.mxu0 0.0
  %346 = vmatprep.subr.mxu0 0.0
  %347 = vmatpush1.msra.mxu0 0.0
  %348 = vmatprep.subr.mxu0 0.0
  %349 = vmatpush1.msra.mxu0 0.0
  %350 = vmatprep.subr.mxu0 0.0
  %351 = vmatpush1.msra.mxu0 0.0
  %352 = vmatprep.subr.mxu0 0.0
  %353 = vmatpush1.msra.mxu0 0.0
  %354 = vmatprep.subr.mxu0 0.0
  %355 = vmatpush1.msra.mxu0 0.0
  %356 = vmatprep.subr.mxu0 0.0
  %357 = vmatpush1.msra.mxu0 0.0
  %358 = vmatprep.subr.mxu0 0.0
  %359 = vmatpush1.msra.mxu0 0.0
  %360 = vmatprep.subr.mxu0 0.0
  %361 = vmatpush1.msra.mxu0 0.0
  %362 = vmatprep.subr.mxu0 0.0
  %363 = vmatpush1.msra.mxu0 0.0
  %364 = vmatprep.subr.mxu0 0.0
  %365 = vmatpush1.msra.mxu0 0.0
  %366 = vmatprep.subr.mxu0 0.0
  %367 = vmatpush1.msra.mxu0 0.0
  %368 = vmatprep.subr.mxu0 0.0
  %369 = vmatpush1.msra.mxu0 0.0
  %370 = vmatprep.subr.mxu0 0.0
  %371 = vmatpush1.msra.mxu0 0.0
  %372 = vmatprep.subr.mxu0 0.0
  %373 = vmatpush1.msra.mxu0 0.0
  %374 = vmatprep.subr.mxu0 0.0
  %375 = vmatpush1.msra.mxu0 0.0
  %376 = vmatprep.subr.mxu0 0.0
  %377 = vmatpush1.msra.mxu0 0.0
  %378 = vmatprep.subr.mxu0 0.0
  %379 = vmatpush1.msra.mxu0 0.0
  %380 = vmatprep.subr.mxu0 0.0
  %381 = vmatpush1.msra.mxu0 0.0
  %382 = vmatprep.subr.mxu0 0.0
  %383 = vmatpush1.msra.mxu0 0.0
  %384 = vmatprep.subr.mxu0 0.0
  %385 = vmatpush1.msra.mxu0 0.0
  %386 = vmatprep.subr.mxu0 0.0
  %387 = vmatpush1.msra.mxu0 0.0
  %388 = vmatprep.mubr.f32.mxu0 0.0
  %389 = vmatmul.mubr.f32.gmra.mrb[0].mxu0 %v319
  %v390 = vpop.f32.mrb[0].mxu0
  %v391 = vadd.f32 %v316, %v390
  %v392 = vpop.f32.mrb[0].mxu0
  %393 = vmatprep.mubr.f32.mxu0 0.0
  %394 = vmatmul.mubr.f32.gmra.mrb[0].mxu0 %v322
  %v395 = vpop.f32.mrb[0].mxu0
  %v396 = vadd.f32 %v316, %v395
  %v397 = vpop.f32.mrb[0].mxu0
  %398 = vdwg.mxu0
  %v399 = vadd.f32 %v32, %v391
  %v400 = vadd.f32 %v33, %v396
  %401 = vst.msk [vmem:[%s9] sm:$0xff] %vm38, %v399
  %402 = vst.msk [vmem:[%s9 + $0x8] sm:$0xff] %vm38, %v400
  // Predicated region
  $region38: #{_rf_forward_2d.1} parent=0 // pred_check
    _
  $region39: #{_rf_forward_2d.1} parent=0 // pred_check_branch
    %404 = sbr.rel (0) target = $region41
  $region40: #{_rf_forward_2d.1} parent=0 // pred_region
    _
  $region41: #{_rf_forward_2d.1} parent=0 // pred_fallthru
    _
  // Predicated region
  $region42: #{_rf_forward_2d.1} parent=0 // pred_check
    _
  $region43: #{_rf_forward_2d.1} parent=0 // pred_check_branch
    %406 = sbr.rel (0) target = $region45
  $region44: #{_rf_forward_2d.1} parent=0 // pred_region
    _
  $region45: #{_rf_forward_2d.1} parent=0 // pred_fallthru
    _

</llo_original>
